<compile_context>
chip_gen: v5e
topology: v5e:2x2
jax: 0.10.0
libtpu: 0.0.40
codegen_flags: <defaults>
</compile_context>

<pallas_src>
import functools

import jax
import jax.numpy as jnp
from jax import lax
from jax.experimental import pallas as pl
from jax.experimental.pallas import tpu as pltpu


def _self_attention_kernel(x_ref, bias_ref, wqkv_ref, wo_ref, o_ref, cat_ref,
                           *, heads, head_dim):
    """One block of TB ganged batch elements per grid step.

    Layouts (per perf review):
      x_ref    : (R, E) bf16, R = TB*S flattened rows.
      bias_ref : (R, R) f32 block-diagonal mask (0 within a batch element,
                 -1e30 across elements) so ganged rows never attend cross-batch.
      wqkv_ref : (3*H*hd, E) bf16 = [Wq^T*scale | Wk^T | Wv^T], head-major on the
                 sublane axis -> every Q/K/V/head split below is a sublane slice
                 at 8-row granularity (no lane-offset slices, no lane concat).
      wo_ref   : (H*hd, E) bf16.
      cat_ref  : (H*hd, R) f32 VMEM scratch collecting per-head outputs
                 (transposed); bounds vreg live ranges, feeds one fused matmul.
    """
    hh = heads * head_dim

    x = x_ref[...]                         # (R, E)   bf16
    w_qkv = wqkv_ref[...]                  # (3hh, E) bf16

    # Fused QKV projection for all heads, produced transposed: (3hh, R).
    # Contract the E axes of both operands directly (A @ B^T form): no
    # materialized x^T here and no k.T later.
    qkv_t = lax.dot_general(
        w_qkv, x, (((1,), (1,)), ((), ())),
        preferred_element_type=jnp.float32)            # (3hh, R) f32

    bias = bias_ref[...]                   # (R, R) f32

    for h in range(heads):                 # static unrolled loop, H is small
        lo = h * head_dim
        q_t = qkv_t[lo:lo + head_dim, :].astype(jnp.bfloat16)             # (hd, R)
        k_t = qkv_t[hh + lo:hh + lo + head_dim, :].astype(jnp.bfloat16)   # (hd, R)
        v_t = qkv_t[2 * hh + lo:2 * hh + lo + head_dim, :].astype(jnp.bfloat16)

        # scores[q, k] = sum_d q_t[d, q] * k_t[d, k]; the 1/sqrt(hd) scale is
        # already folded into the Q weights wrapper-side.
        scores = lax.dot_general(
            q_t, k_t, (((0,), (0,)), ((), ())),
            preferred_element_type=jnp.float32) + bias                    # (R, R)

        # Numerically-stable softmax over keys; all elementwise math in f32,
        # division -> EUP reciprocal.
        m = jnp.max(scores, axis=-1, keepdims=True)
        e = jnp.exp(scores - m)
        denom = jnp.sum(e, axis=-1, keepdims=True)
        attn = (e * pl.reciprocal(denom, approx=True)).astype(jnp.bfloat16)

        # out_h^T[d, q] = sum_k v_t[d, k] * attn[q, k]  -> (hd, R)
        out_h_t = lax.dot_general(
            v_t, attn, (((1,), (1,)), ((), ())),
            preferred_element_type=jnp.float32)

        # Sublane-aligned (8-row) write into the scratch slab.
        cat_ref[lo:lo + head_dim, :] = out_h_t

    # Single fused output projection: out[r, e] = sum_c cat^T[c, r] * wo[c, e].
    out = lax.dot_general(
        cat_ref[...].astype(jnp.bfloat16), wo_ref[...],
        (((0,), (0,)), ((), ())),
        preferred_element_type=jnp.float32)            # (R, E) f32
    o_ref[...] = out


def _pick_batch_block(B, S):
    """Gang enough batch elements per grid step to push rows toward the MXU M
    dimension (~128), while keeping >= 2 grid steps when B allows so both v7x
    TensorCores get a parallel slice (no-op on v5e/v6e)."""
    tb = max(1, min(B, 128 // max(S, 1)))
    if B >= 2:
        tb = max(1, min(tb, B // 2))
    while B % tb:
        tb -= 1
    return tb


def self_attention(x, wq, wk, wv, wo_t, *, batch_block=None):
    """x: (B, S, E); wq/wk/wv: (H, E, hd) (per-head Linear weights, transposed);
    wo_t: (H, hd, E) (= Wo^T split per head). Returns (B, S, E) float32."""
    B, S, E = x.shape
    H, _, hd = wq.shape
    hh = H * hd
    scale = 1.0 / (hd ** 0.5)

    tb = batch_block if batch_block is not None else _pick_batch_block(B, S)
    assert B % tb == 0, "batch block must divide B"
    R = tb * S

    # --- wrapper-side (traced-once) layout + dtype prep ------------------------
    # Transposed per-head weights stacked head-major along the sublane axis:
    # rows [h*hd:(h+1)*hd] of each block are W_{q,k,v}[h]^T of shape (hd, E).
    wq_t = jnp.transpose(wq, (0, 2, 1)).reshape(hh, E) * scale   # scale folded into Q
    wk_t = jnp.transpose(wk, (0, 2, 1)).reshape(hh, E)
    wv_t = jnp.transpose(wv, (0, 2, 1)).reshape(hh, E)
    w_qkv = jnp.concatenate([wq_t, wk_t, wv_t], axis=0).astype(jnp.bfloat16)  # (3hh, E)
    wo = wo_t.reshape(hh, E).astype(jnp.bfloat16)                             # (hh, E)

    # Flatten batch*seq into rows (free reshape) and halve DMA with bf16.
    x2 = x.reshape(B * S, E).astype(jnp.bfloat16)

    # Block-diagonal additive bias: ganged rows only attend within their own
    # batch element (all zeros when tb == 1).
    bid = jnp.arange(R, dtype=jnp.int32) // S
    bias = jnp.where(bid[:, None] == bid[None, :], 0.0, -1e30).astype(jnp.float32)

    kernel = functools.partial(_self_attention_kernel, heads=H, head_dim=hd)

    out2 = pl.pallas_call(
        kernel,
        out_shape=jax.ShapeDtypeStruct((B * S, E), jnp.float32),
        grid_spec=pltpu.PrefetchScalarGridSpec(
            num_scalar_prefetch=0,
            grid=(B // tb,),
            in_specs=[
                # per-step block of ganged batch rows
                pl.BlockSpec((R, E), lambda b: (b, 0)),
                # constant-index residents: single-buffered (pl.Buffered(1)),
                # halving their VMEM footprint at production sizes.
                pl.BlockSpec((R, R), lambda b: (0, 0),
                             pipeline_mode=pl.Buffered(1)),
                pl.BlockSpec((3 * hh, E), lambda b: (0, 0),
                             pipeline_mode=pl.Buffered(1)),
                pl.BlockSpec((hh, E), lambda b: (0, 0),
                             pipeline_mode=pl.Buffered(1)),
            ],
            out_specs=pl.BlockSpec((R, E), lambda b: (b, 0)),
            scratch_shapes=[pltpu.VMEM((hh, R), jnp.float32)],
        ),
        compiler_params=pltpu.CompilerParams(
            dimension_semantics=("parallel",),
            # Explicit scoped-VMEM limit (v5e default is only 16 MiB).
            vmem_limit_bytes=32 * 1024 * 1024,
        ),
    )(x2, bias, w_qkv, wo)

    return out2.reshape(B, S, E)


def self_attention_reference(x, wq, wk, wv, wo_t):
    """Pure-JAX reference mirroring the PyTorch forward (mask=None)."""
    H, _, hd = wq.shape
    outs = []
    for h in range(H):
        q = x @ wq[h]
        k = x @ wk[h]
        v = x @ wv[h]
        dot = jnp.einsum('iqd,ikd->iqk', q, k)
        attn = jax.nn.softmax(dot / (hd ** 0.5), axis=2)
        outs.append(jnp.einsum('iqk,ikd->iqd', attn, v))
    cat = jnp.concatenate(outs, axis=2)                  # (B, S, H*hd)
    wo_full = wo_t.reshape(H * hd, -1)                   # (H*hd, E)
    return cat @ wo_full


if __name__ == "__main__":
    # Small shapes consistent with the module: embed_size=32, heads=4, head_dim=8.
    # B=4 so the default heuristic gangs 2 batch elements per grid step and still
    # leaves 2 parallel grid steps.
    B, S, E, H = 4, 8, 32, 4
    hd = E // H

    key = jax.random.PRNGKey(0)
    kx, kq, kk, kv, ko = jax.random.split(key, 5)

    x = jax.random.normal(kx, (B, S, E), dtype=jnp.float32)
    # Per-head Linear(E -> hd, bias=False) weights, stored transposed: (H, E, hd)
    wq = jax.random.normal(kq, (H, E, hd), dtype=jnp.float32) * 0.1
    wk = jax.random.normal(kk, (H, E, hd), dtype=jnp.float32) * 0.1
    wv = jax.random.normal(kv, (H, E, hd), dtype=jnp.float32) * 0.1
    # Final Linear(H*hd -> E, bias=False), stored as Wo^T split per head: (H, hd, E)
    wo_t = jax.random.normal(ko, (H, hd, E), dtype=jnp.float32) * 0.1

    out = jax.block_until_ready(self_attention(x, wq, wk, wv, wo_t))

    ref = self_attention_reference(x, wq, wk, wv, wo_t)
    assert out.shape == (B, S, E)
    # Tolerance accommodates bf16 MXU inputs (f32 accumulation) plus the EUP
    # approximate reciprocal used for the softmax normalization.
    assert jnp.allclose(out, ref, atol=5e-2, rtol=5e-2), "mismatch vs reference"

    print("KERNEL_OK")
</pallas_src>

<mosaic_0001>
module attributes {stable_mosaic.version = 11 : i64} {
  func.func @_self_attention_kernel(%arg0: i32, %arg1: memref<16x32xbf16, #tpu.memory_space<vmem>>, %arg2: memref<16x16xf32, #tpu.memory_space<vmem>>, %arg3: memref<96x32xbf16, #tpu.memory_space<vmem>>, %arg4: memref<32x32xbf16, #tpu.memory_space<vmem>>, %arg5: memref<16x32xf32, #tpu.memory_space<vmem>>, %arg6: memref<32x16xf32, #tpu.memory_space<vmem>>) attributes {dimension_semantics = [#tpu.dimension_semantics<parallel>], iteration_bounds = array<i64: 2>, scalar_prefetch = 0 : i64, scratch_operands = 1 : i64, tpu.core_type = #tpu.core_type<tc>, window_params = [{transform_indices = @transform_0, window_bounds = array<i64: 16, 32>}, {pipeline_mode = #tpu.pipeline_mode<synchronous>, transform_indices = @transform_1, window_bounds = array<i64: 16, 16>}, {pipeline_mode = #tpu.pipeline_mode<synchronous>, transform_indices = @transform_2, window_bounds = array<i64: 96, 32>}, {pipeline_mode = #tpu.pipeline_mode<synchronous>, transform_indices = @transform_3, window_bounds = array<i64: 32, 32>}, {transform_indices = @transform_4, window_bounds = array<i64: 16, 32>}]} {
    %c0 = arith.constant 0 : index
    %c0_0 = arith.constant 0 : index
    %0 = vector.load %arg1[%c0, %c0_0] : memref<16x32xbf16, #tpu.memory_space<vmem>>, vector<16x32xbf16>
    %c0_1 = arith.constant 0 : index
    %c0_2 = arith.constant 0 : index
    %1 = vector.load %arg3[%c0_1, %c0_2] : memref<96x32xbf16, #tpu.memory_space<vmem>>, vector<96x32xbf16>
    %cst = arith.constant dense<0.000000e+00> : vector<96x16xf32>
    %2 = tpu.matmul %1, %0, %cst {dimension_numbers = #tpu.dot_dimension_numbers<[1], [1], [0], [0], [0, 0, 1, 0], [], []>} : vector<96x32xbf16>, vector<16x32xbf16>, vector<96x16xf32> -> vector<96x16xf32>
    %c0_3 = arith.constant 0 : index
    %c0_4 = arith.constant 0 : index
    %3 = vector.load %arg2[%c0_3, %c0_4] : memref<16x16xf32, #tpu.memory_space<vmem>>, vector<16x16xf32>
    %4 = vector.extract_strided_slice %2 {offsets = [0, 0], sizes = [8, 16], strides = [1, 1]} : vector<96x16xf32> to vector<8x16xf32>
    %5 = arith.truncf %4 : vector<8x16xf32> to vector<8x16xbf16>
    %6 = vector.extract_strided_slice %2 {offsets = [32, 0], sizes = [8, 16], strides = [1, 1]} : vector<96x16xf32> to vector<8x16xf32>
    %7 = arith.truncf %6 : vector<8x16xf32> to vector<8x16xbf16>
    %8 = vector.extract_strided_slice %2 {offsets = [64, 0], sizes = [8, 16], strides = [1, 1]} : vector<96x16xf32> to vector<8x16xf32>
    %9 = arith.truncf %8 : vector<8x16xf32> to vector<8x16xbf16>
    %cst_5 = arith.constant dense<0.000000e+00> : vector<16x16xf32>
    %10 = tpu.matmul %5, %7, %cst_5 {dimension_numbers = #tpu.dot_dimension_numbers<[0], [0], [1], [1], [0, 1, 1, 1], [], []>} : vector<8x16xbf16>, vector<8x16xbf16>, vector<16x16xf32> -> vector<16x16xf32>
    %11 = arith.addf %10, %3 : vector<16x16xf32>
    %cst_6 = arith.constant dense<0xFF800000> : vector<16xf32>
    %12 = vector.multi_reduction <maximumf>, %11, %cst_6 [1] : vector<16x16xf32> to vector<16xf32>
    %13 = vector.shape_cast %12 : vector<16xf32> to vector<16x1xf32>
    %14 = vector.broadcast %13 : vector<16x1xf32> to vector<16x16xf32>
    %15 = arith.subf %11, %14 : vector<16x16xf32>
    %16 = math.exp %15 : vector<16x16xf32>
    %cst_7 = arith.constant dense<0.000000e+00> : vector<16xf32>
    %17 = vector.multi_reduction <add>, %16, %cst_7 [1] : vector<16x16xf32> to vector<16xf32>
    %18 = vector.shape_cast %17 : vector<16xf32> to vector<16x1xf32>
    %19 = tpu.reciprocal %18 {approx = true} : vector<16x1xf32> -> vector<16x1xf32>
    %20 = vector.broadcast %19 : vector<16x1xf32> to vector<16x16xf32>
    %21 = arith.mulf %16, %20 : vector<16x16xf32>
    %22 = arith.truncf %21 : vector<16x16xf32> to vector<16x16xbf16>
    %cst_8 = arith.constant dense<0.000000e+00> : vector<8x16xf32>
    %23 = tpu.matmul %9, %22, %cst_8 {dimension_numbers = #tpu.dot_dimension_numbers<[1], [1], [0], [0], [0, 0, 1, 0], [], []>} : vector<8x16xbf16>, vector<16x16xbf16>, vector<8x16xf32> -> vector<8x16xf32>
    %c0_9 = arith.constant 0 : index
    %c0_10 = arith.constant 0 : index
    %24 = vector.load %arg6[%c0_9, %c0_10] : memref<32x16xf32, #tpu.memory_space<vmem>>, vector<8x16xf32>
    tpu.vector_store %arg6[%c0_9, %c0_10], %23 {strides = array<i32>} : memref<32x16xf32, #tpu.memory_space<vmem>>, vector<8x16xf32>,
    %25 = vector.extract_strided_slice %2 {offsets = [8, 0], sizes = [8, 16], strides = [1, 1]} : vector<96x16xf32> to vector<8x16xf32>
    %26 = arith.truncf %25 : vector<8x16xf32> to vector<8x16xbf16>
    %27 = vector.extract_strided_slice %2 {offsets = [40, 0], sizes = [8, 16], strides = [1, 1]} : vector<96x16xf32> to vector<8x16xf32>
    %28 = arith.truncf %27 : vector<8x16xf32> to vector<8x16xbf16>
    %29 = vector.extract_strided_slice %2 {offsets = [72, 0], sizes = [8, 16], strides = [1, 1]} : vector<96x16xf32> to vector<8x16xf32>
    %30 = arith.truncf %29 : vector<8x16xf32> to vector<8x16xbf16>
    %cst_11 = arith.constant dense<0.000000e+00> : vector<16x16xf32>
    %31 = tpu.matmul %26, %28, %cst_11 {dimension_numbers = #tpu.dot_dimension_numbers<[0], [0], [1], [1], [0, 1, 1, 1], [], []>} : vector<8x16xbf16>, vector<8x16xbf16>, vector<16x16xf32> -> vector<16x16xf32>
    %32 = arith.addf %31, %3 : vector<16x16xf32>
    %cst_12 = arith.constant dense<0xFF800000> : vector<16xf32>
    %33 = vector.multi_reduction <maximumf>, %32, %cst_12 [1] : vector<16x16xf32> to vector<16xf32>
    %34 = vector.shape_cast %33 : vector<16xf32> to vector<16x1xf32>
    %35 = vector.broadcast %34 : vector<16x1xf32> to vector<16x16xf32>
    %36 = arith.subf %32, %35 : vector<16x16xf32>
    %37 = math.exp %36 : vector<16x16xf32>
    %cst_13 = arith.constant dense<0.000000e+00> : vector<16xf32>
    %38 = vector.multi_reduction <add>, %37, %cst_13 [1] : vector<16x16xf32> to vector<16xf32>
    %39 = vector.shape_cast %38 : vector<16xf32> to vector<16x1xf32>
    %40 = tpu.reciprocal %39 {approx = true} : vector<16x1xf32> -> vector<16x1xf32>
    %41 = vector.broadcast %40 : vector<16x1xf32> to vector<16x16xf32>
    %42 = arith.mulf %37, %41 : vector<16x16xf32>
    %43 = arith.truncf %42 : vector<16x16xf32> to vector<16x16xbf16>
    %cst_14 = arith.constant dense<0.000000e+00> : vector<8x16xf32>
    %44 = tpu.matmul %30, %43, %cst_14 {dimension_numbers = #tpu.dot_dimension_numbers<[1], [1], [0], [0], [0, 0, 1, 0], [], []>} : vector<8x16xbf16>, vector<16x16xbf16>, vector<8x16xf32> -> vector<8x16xf32>
    %c8 = arith.constant 8 : index
    %c0_15 = arith.constant 0 : index
    %45 = vector.load %arg6[%c8, %c0_15] : memref<32x16xf32, #tpu.memory_space<vmem>>, vector<8x16xf32>
    tpu.vector_store %arg6[%c8, %c0_15], %44 {strides = array<i32>} : memref<32x16xf32, #tpu.memory_space<vmem>>, vector<8x16xf32>,
    %46 = vector.extract_strided_slice %2 {offsets = [16, 0], sizes = [8, 16], strides = [1, 1]} : vector<96x16xf32> to vector<8x16xf32>
    %47 = arith.truncf %46 : vector<8x16xf32> to vector<8x16xbf16>
    %48 = vector.extract_strided_slice %2 {offsets = [48, 0], sizes = [8, 16], strides = [1, 1]} : vector<96x16xf32> to vector<8x16xf32>
    %49 = arith.truncf %48 : vector<8x16xf32> to vector<8x16xbf16>
    %50 = vector.extract_strided_slice %2 {offsets = [80, 0], sizes = [8, 16], strides = [1, 1]} : vector<96x16xf32> to vector<8x16xf32>
    %51 = arith.truncf %50 : vector<8x16xf32> to vector<8x16xbf16>
    %cst_16 = arith.constant dense<0.000000e+00> : vector<16x16xf32>
    %52 = tpu.matmul %47, %49, %cst_16 {dimension_numbers = #tpu.dot_dimension_numbers<[0], [0], [1], [1], [0, 1, 1, 1], [], []>} : vector<8x16xbf16>, vector<8x16xbf16>, vector<16x16xf32> -> vector<16x16xf32>
    %53 = arith.addf %52, %3 : vector<16x16xf32>
    %cst_17 = arith.constant dense<0xFF800000> : vector<16xf32>
    %54 = vector.multi_reduction <maximumf>, %53, %cst_17 [1] : vector<16x16xf32> to vector<16xf32>
    %55 = vector.shape_cast %54 : vector<16xf32> to vector<16x1xf32>
    %56 = vector.broadcast %55 : vector<16x1xf32> to vector<16x16xf32>
    %57 = arith.subf %53, %56 : vector<16x16xf32>
    %58 = math.exp %57 : vector<16x16xf32>
    %cst_18 = arith.constant dense<0.000000e+00> : vector<16xf32>
    %59 = vector.multi_reduction <add>, %58, %cst_18 [1] : vector<16x16xf32> to vector<16xf32>
    %60 = vector.shape_cast %59 : vector<16xf32> to vector<16x1xf32>
    %61 = tpu.reciprocal %60 {approx = true} : vector<16x1xf32> -> vector<16x1xf32>
    %62 = vector.broadcast %61 : vector<16x1xf32> to vector<16x16xf32>
    %63 = arith.mulf %58, %62 : vector<16x16xf32>
    %64 = arith.truncf %63 : vector<16x16xf32> to vector<16x16xbf16>
    %cst_19 = arith.constant dense<0.000000e+00> : vector<8x16xf32>
    %65 = tpu.matmul %51, %64, %cst_19 {dimension_numbers = #tpu.dot_dimension_numbers<[1], [1], [0], [0], [0, 0, 1, 0], [], []>} : vector<8x16xbf16>, vector<16x16xbf16>, vector<8x16xf32> -> vector<8x16xf32>
    %c16 = arith.constant 16 : index
    %c0_20 = arith.constant 0 : index
    %66 = vector.load %arg6[%c16, %c0_20] : memref<32x16xf32, #tpu.memory_space<vmem>>, vector<8x16xf32>
    tpu.vector_store %arg6[%c16, %c0_20], %65 {strides = array<i32>} : memref<32x16xf32, #tpu.memory_space<vmem>>, vector<8x16xf32>,
    %67 = vector.extract_strided_slice %2 {offsets = [24, 0], sizes = [8, 16], strides = [1, 1]} : vector<96x16xf32> to vector<8x16xf32>
    %68 = arith.truncf %67 : vector<8x16xf32> to vector<8x16xbf16>
    %69 = vector.extract_strided_slice %2 {offsets = [56, 0], sizes = [8, 16], strides = [1, 1]} : vector<96x16xf32> to vector<8x16xf32>
    %70 = arith.truncf %69 : vector<8x16xf32> to vector<8x16xbf16>
    %71 = vector.extract_strided_slice %2 {offsets = [88, 0], sizes = [8, 16], strides = [1, 1]} : vector<96x16xf32> to vector<8x16xf32>
    %72 = arith.truncf %71 : vector<8x16xf32> to vector<8x16xbf16>
    %cst_21 = arith.constant dense<0.000000e+00> : vector<16x16xf32>
    %73 = tpu.matmul %68, %70, %cst_21 {dimension_numbers = #tpu.dot_dimension_numbers<[0], [0], [1], [1], [0, 1, 1, 1], [], []>} : vector<8x16xbf16>, vector<8x16xbf16>, vector<16x16xf32> -> vector<16x16xf32>
    %74 = arith.addf %73, %3 : vector<16x16xf32>
    %cst_22 = arith.constant dense<0xFF800000> : vector<16xf32>
    %75 = vector.multi_reduction <maximumf>, %74, %cst_22 [1] : vector<16x16xf32> to vector<16xf32>
    %76 = vector.shape_cast %75 : vector<16xf32> to vector<16x1xf32>
    %77 = vector.broadcast %76 : vector<16x1xf32> to vector<16x16xf32>
    %78 = arith.subf %74, %77 : vector<16x16xf32>
    %79 = math.exp %78 : vector<16x16xf32>
    %cst_23 = arith.constant dense<0.000000e+00> : vector<16xf32>
    %80 = vector.multi_reduction <add>, %79, %cst_23 [1] : vector<16x16xf32> to vector<16xf32>
    %81 = vector.shape_cast %80 : vector<16xf32> to vector<16x1xf32>
    %82 = tpu.reciprocal %81 {approx = true} : vector<16x1xf32> -> vector<16x1xf32>
    %83 = vector.broadcast %82 : vector<16x1xf32> to vector<16x16xf32>
    %84 = arith.mulf %79, %83 : vector<16x16xf32>
    %85 = arith.truncf %84 : vector<16x16xf32> to vector<16x16xbf16>
    %cst_24 = arith.constant dense<0.000000e+00> : vector<8x16xf32>
    %86 = tpu.matmul %72, %85, %cst_24 {dimension_numbers = #tpu.dot_dimension_numbers<[1], [1], [0], [0], [0, 0, 1, 0], [], []>} : vector<8x16xbf16>, vector<16x16xbf16>, vector<8x16xf32> -> vector<8x16xf32>
    %c24 = arith.constant 24 : index
    %c0_25 = arith.constant 0 : index
    %87 = vector.load %arg6[%c24, %c0_25] : memref<32x16xf32, #tpu.memory_space<vmem>>, vector<8x16xf32>
    tpu.vector_store %arg6[%c24, %c0_25], %86 {strides = array<i32>} : memref<32x16xf32, #tpu.memory_space<vmem>>, vector<8x16xf32>,
    %c0_26 = arith.constant 0 : index
    %c0_27 = arith.constant 0 : index
    %88 = vector.load %arg6[%c0_26, %c0_27] : memref<32x16xf32, #tpu.memory_space<vmem>>, vector<32x16xf32>
    %89 = arith.truncf %88 : vector<32x16xf32> to vector<32x16xbf16>
    %c0_28 = arith.constant 0 : index
    %c0_29 = arith.constant 0 : index
    %90 = vector.load %arg4[%c0_28, %c0_29] : memref<32x32xbf16, #tpu.memory_space<vmem>>, vector<32x32xbf16>
    %cst_30 = arith.constant dense<0.000000e+00> : vector<16x32xf32>
    %91 = tpu.matmul %89, %90, %cst_30 {dimension_numbers = #tpu.dot_dimension_numbers<[0], [0], [1], [1], [0, 1, 1, 1], [], []>} : vector<32x16xbf16>, vector<32x32xbf16>, vector<16x32xf32> -> vector<16x32xf32>
    %c0_31 = arith.constant 0 : index
    %c0_32 = arith.constant 0 : index
    %92 = vector.load %arg5[%c0_31, %c0_32] : memref<16x32xf32, #tpu.memory_space<vmem>>, vector<16x32xf32>
    tpu.vector_store %arg5[%c0_31, %c0_32], %91 {strides = array<i32>} : memref<16x32xf32, #tpu.memory_space<vmem>>, vector<16x32xf32>,
    return
  }
  func.func @transform_0(%arg0: i32) -> (i32, i32) {
    %c0_i32 = arith.constant 0 : i32
    %c0_i32_0 = arith.constant 0 : i32
    return %arg0, %c0_i32 : i32, i32
  }
  func.func @transform_1(%arg0: i32) -> (i32, i32) {
    %c0_i32 = arith.constant 0 : i32
    %c0_i32_0 = arith.constant 0 : i32
    %c0_i32_1 = arith.constant 0 : i32
    return %c0_i32, %c0_i32_0 : i32, i32
  }
  func.func @transform_2(%arg0: i32) -> (i32, i32) {
    %c0_i32 = arith.constant 0 : i32
    %c0_i32_0 = arith.constant 0 : i32
    %c0_i32_1 = arith.constant 0 : i32
    return %c0_i32, %c0_i32_0 : i32, i32
  }
  func.func @transform_3(%arg0: i32) -> (i32, i32) {
    %c0_i32 = arith.constant 0 : i32
    %c0_i32_0 = arith.constant 0 : i32
    %c0_i32_1 = arith.constant 0 : i32
    return %c0_i32, %c0_i32_0 : i32, i32
  }
  func.func @transform_4(%arg0: i32) -> (i32, i32) {
    %c0_i32 = arith.constant 0 : i32
    %c0_i32_0 = arith.constant 0 : i32
    return %arg0, %c0_i32 : i32, i32
  }
}

</mosaic_0001>

<llo_original>
// kernel: tpu_custom_call.1
$region0: #{tpu_custom_call.1}
  #allocation0 [shape = 'u32[]', space=smem, size = 0x4, offset = 0x4, fixed_abs, tag = 'smem constant byte address 0x4 - core index']
  #allocation1 [shape = 'u32[72,128]{1,0:T(1,128)}', space=vmem, size = 0x9000, scoped, tag = 'internal scratch']
  #allocation2 [shape = 'f32[32,16]{1,0:T(8,128)}', space=vmem, size = 0x4000, scoped, tag = 'scratch operand']
  %s0 = inlined_call_operand.vmem [shape: bf16[32,32], index: 0, kind: input, shape index: {}]
  %s1 = inlined_call_operand.vmem [shape: f32[16,16], index: 1, kind: input, shape index: {}]
  %s2 = inlined_call_operand.vmem [shape: bf16[96,32], index: 2, kind: input, shape index: {}]
  %s3 = inlined_call_operand.vmem [shape: bf16[32,32], index: 3, kind: input, shape index: {}]
  %s4 = inlined_call_operand.hbm [shape: f32[32,32], index: 4, kind: output, shape index: {}]
  %s5 = sld [smem:[#allocation0]]
  $region49: #{tpu_custom_call.1} parent=0
    _
  %s7 = ssub.s32 1, %s5
  %s8 = scalar_select 0, %s7, %s5
  $region1: #{tpu_custom_call.1} parent=0
    #allocation3 [shape = 'u8[16384]{0}', space=vmem, size = 0x4000, scoped, tag = 'output window, operand 0']
    #allocation4 [shape = 's32[2]{0}', space=sflag, size = 0x8, scoped, tag = 'scoped memory for tpu_custom_call.1']
    %9 = vsyncpa [#allocation4], 0
    %s10 = scalar_lea.sflag [#allocation4], 1
    %11 = vsyncpa %s10, 0
    loop: start=0, step=1, limit=4
    $region2: #{tpu_custom_call.1} parent=1 // loop_pre_header
      _
    $region3: #{tpu_custom_call.1} parent=1 // loop_header
      %s13 = sphi 0, %s17
      %p14 = scmp.ge.s32.totalorder %s13, 4
      %s23 = sphi 0, %s25
      %s26 = sphi 0, %s23
      %s27 = sphi 0, %s26
      %s43 = sphi 0, %s27
      %s47 = sphi 0, %s47
      %s49 = sphi 0, %s47
      %s50 = sphi 0, %s49
      %s64 = sphi 0, %s50
      %s68 = sphi 0, %s68
      %s70 = sphi 0, %s68
      %s71 = sphi 0, %s70
      %s85 = sphi 0, %s71
      %s89 = sphi 0, %s89
      %s91 = sphi 0, %s89
      %s92 = sphi 0, %s91
      %s106 = sphi 0, %s92
      %s112 = sphi 0, %s114
      %s115 = sphi 0, %s112
      %s116 = sphi 0, %s115
      %s132 = sphi 0, %s116
    $region4: #{tpu_custom_call.1} parent=1 // loop_header_branch
      %16 = sbr.rel (%p14) target = $region8
    $region5: #{tpu_custom_call.1} parent=1 // loop_body
      %s18 = ssub.s32 %s13, 1
      %s19 = ssub.s32 %s13, 2
      %s20 = sadd.s32 %s13, 1
      %s21 = ssub.s32 %s13, %s20
      %p22 = scmp.eq.s32.totalorder %s21, 0
      %s24 = sadd.s32 %s23, 1
      %s25 = scalar_select %p22, %s23, %s24
      %p28 = pneg %p22
      %p29 = scmp.eq.s32.totalorder %s13, 1
      %p30 = por %p28, %p29
      %p31 = scmp.ne.s32.totalorder %s23, %s26
      %p32 = scmp.eq.s32.totalorder %s13, 0
      %p33 = por %p31, %p32
      %p34 = scmp.ne.s32.totalorder %s23, %s26
      %p35 = scmp.eq.s32.totalorder %s18, 1
      %p36 = por %p34, %p35
      %p37 = scmp.ne.s32.totalorder %s26, %s27
      %p38 = scmp.eq.s32.totalorder %s18, 0
      %p39 = por %p37, %p38
      %p40 = scmp.ne.s32.totalorder %s26, %s27
      %p41 = scmp.eq.s32.totalorder %s19, 1
      %p42 = por %p40, %p41
      %p44 = scmp.ne.s32.totalorder %s27, %s43
      %p45 = scmp.eq.s32.totalorder %s19, 0
      %p46 = por %p44, %p45
      %s48 = sadd.s32 %s47, 1
      %p51 = scmp.eq.s32.totalorder %s13, 1
      %p52 = scmp.ne.s32.totalorder %s47, %s49
      %p53 = scmp.eq.s32.totalorder %s13, 0
      %p54 = por %p52, %p53
      %p55 = scmp.ne.s32.totalorder %s47, %s49
      %p56 = scmp.eq.s32.totalorder %s18, 1
      %p57 = por %p55, %p56
      %p58 = scmp.ne.s32.totalorder %s49, %s50
      %p59 = scmp.eq.s32.totalorder %s18, 0
      %p60 = por %p58, %p59
      %p61 = scmp.ne.s32.totalorder %s49, %s50
      %p62 = scmp.eq.s32.totalorder %s19, 1
      %p63 = por %p61, %p62
      %p65 = scmp.ne.s32.totalorder %s50, %s64
      %p66 = scmp.eq.s32.totalorder %s19, 0
      %p67 = por %p65, %p66
      %s69 = sadd.s32 %s68, 1
      %p72 = scmp.eq.s32.totalorder %s13, 1
      %p73 = scmp.ne.s32.totalorder %s68, %s70
      %p74 = scmp.eq.s32.totalorder %s13, 0
      %p75 = por %p73, %p74
      %p76 = scmp.ne.s32.totalorder %s68, %s70
      %p77 = scmp.eq.s32.totalorder %s18, 1
      %p78 = por %p76, %p77
      %p79 = scmp.ne.s32.totalorder %s70, %s71
      %p80 = scmp.eq.s32.totalorder %s18, 0
      %p81 = por %p79, %p80
      %p82 = scmp.ne.s32.totalorder %s70, %s71
      %p83 = scmp.eq.s32.totalorder %s19, 1
      %p84 = por %p82, %p83
      %p86 = scmp.ne.s32.totalorder %s71, %s85
      %p87 = scmp.eq.s32.totalorder %s19, 0
      %p88 = por %p86, %p87
      %s90 = sadd.s32 %s89, 1
      %p93 = scmp.eq.s32.totalorder %s13, 1
      %p94 = scmp.ne.s32.totalorder %s89, %s91
      %p95 = scmp.eq.s32.totalorder %s13, 0
      %p96 = por %p94, %p95
      %p97 = scmp.ne.s32.totalorder %s89, %s91
      %p98 = scmp.eq.s32.totalorder %s18, 1
      %p99 = por %p97, %p98
      %p100 = scmp.ne.s32.totalorder %s91, %s92
      %p101 = scmp.eq.s32.totalorder %s18, 0
      %p102 = por %p100, %p101
      %p103 = scmp.ne.s32.totalorder %s91, %s92
      %p104 = scmp.eq.s32.totalorder %s19, 1
      %p105 = por %p103, %p104
      %p107 = scmp.ne.s32.totalorder %s92, %s106
      %p108 = scmp.eq.s32.totalorder %s19, 0
      %p109 = por %p107, %p108
      %s110 = ssub.s32 %s13, %s20
      %p111 = scmp.eq.s32.totalorder %s110, 0
      %s113 = sadd.s32 %s112, 1
      %s114 = scalar_select %p111, %s112, %s113
      %p117 = pneg %p111
      %p118 = scmp.eq.s32.totalorder %s13, 1
      %p119 = por %p117, %p118
      %p120 = scmp.ne.s32.totalorder %s112, %s115
      %p121 = scmp.eq.s32.totalorder %s13, 0
      %p122 = por %p120, %p121
      %p123 = scmp.ne.s32.totalorder %s112, %s115
      %p124 = scmp.eq.s32.totalorder %s18, 1
      %p125 = por %p123, %p124
      %p126 = scmp.ne.s32.totalorder %s115, %s116
      %p127 = scmp.eq.s32.totalorder %s18, 0
      %p128 = por %p126, %p127
      %p129 = scmp.ne.s32.totalorder %s115, %s116
      %p130 = scmp.eq.s32.totalorder %s19, 1
      %p131 = por %p129, %p130
      %p133 = scmp.ne.s32.totalorder %s116, %s132
      %p134 = scmp.eq.s32.totalorder %s19, 0
      %p135 = por %p133, %p134
      %p136 = scmp.le.s32.totalorder 1, %s13
      %p137 = scmp.lt.s32.totalorder %s13, 3
      %p138 = pnand %p136, %p137
      %p139 = pneg %p138
      // Predicated region
      $region9: #{tpu_custom_call.1} parent=5 // pred_check
        _
      $region10: #{tpu_custom_call.1} parent=5 // pred_check_branch
        %141 = sbr.rel (%p138) target = $region12
      $region11: #{tpu_custom_call.1} parent=5 // pred_region
        %s142 = ssub.s32 %s13, 1
        // Predicated region
        $region13: #{tpu_custom_call.1} parent=11 // pred_check
          %p143 = pneg %p60
        $region14: #{tpu_custom_call.1} parent=11 // pred_check_branch
          %145 = sbr.rel (%p143) target = $region16
        $region15: #{tpu_custom_call.1} parent=11 // pred_region
          _
        $region16: #{tpu_custom_call.1} parent=11 // pred_fallthru
          _
        // Predicated region
        $region17: #{tpu_custom_call.1} parent=11 // pred_check
          %p146 = pneg %p81
        $region18: #{tpu_custom_call.1} parent=11 // pred_check_branch
          %148 = sbr.rel (%p146) target = $region20
        $region19: #{tpu_custom_call.1} parent=11 // pred_region
          _
        $region20: #{tpu_custom_call.1} parent=11 // pred_fallthru
          _
        // Predicated region
        $region21: #{tpu_custom_call.1} parent=11 // pred_check
          %p149 = pneg %p102
        $region22: #{tpu_custom_call.1} parent=11 // pred_check_branch
          %151 = sbr.rel (%p149) target = $region24
        $region23: #{tpu_custom_call.1} parent=11 // pred_region
          _
        $region24: #{tpu_custom_call.1} parent=11 // pred_fallthru
          _
      $region12: #{tpu_custom_call.1} parent=5 // pred_fallthru
        _
      %p152 = scmp.lt.s32.totalorder %s13, 2
      // Predicated region
      $region25: #{tpu_custom_call.1} parent=5 // pred_check
        %p153 = pneg %p152
      $region26: #{tpu_custom_call.1} parent=5 // pred_check_branch
        %155 = sbr.rel (%p153) target = $region28
      $region27: #{tpu_custom_call.1} parent=5 // pred_region
        // Predicated region
        $region29: #{tpu_custom_call.1} parent=27 // pred_check
          %p156 = pneg %p33
        $region30: #{tpu_custom_call.1} parent=27 // pred_check_branch
          %158 = sbr.rel (%p156) target = $region32
        $region31: #{tpu_custom_call.1} parent=27 // pred_region
          %s159 = smul.u32 2, %s13
          %p160 = scmp.lt.s32.totalorder %s159, 3
          %s161 = scalar_select %p160, %s159, 3
          %s162 = smul.addr %s161, 4
          %s163 = scalar_lea.vmem %s0, %s162
          %s164 = smul.u32 2, %s13
        $region32: #{tpu_custom_call.1} parent=27 // pred_fallthru
          _
      $region28: #{tpu_custom_call.1} parent=5 // pred_fallthru
        _
      %p165 = scmp.le.s32.totalorder 1, %s13
      %p166 = scmp.lt.s32.totalorder %s13, 3
      %p167 = pnand %p165, %p166
      %p168 = pneg %p167
      // Predicated region
      $region33: #{tpu_custom_call.1} parent=5 // pred_check
        _
      $region34: #{tpu_custom_call.1} parent=5 // pred_check_branch
        %170 = sbr.rel (%p167) target = $region36
      $region35: #{tpu_custom_call.1} parent=5 // pred_region
        %s171 = ssub.s32 %s13, 1
        %s172 = smul.u32 2, %s18
        %p173 = scmp.lt.s32.totalorder %s172, 3
        %s174 = scalar_select %p173, %s172, 3
        %s175 = smul.addr %s174, 4
        %s176 = scalar_lea.vmem %s0, %s175
        %p177 = pneg %p39
        %p178 = pneg %p36
        %p179 = pneg %p60
        %p180 = pneg %p57
        %p181 = pneg %p81
        %p182 = pneg %p78
        %p183 = pneg %p102
        %p184 = pneg %p99
        %p185 = pneg %p128
        %p186 = pneg %p125
        %s187 = sand.u32 %s115, 1
        %s188 = scalar_lea.sflag [#allocation4], %s187
        %s189 = sand.u32 %s115, 1
        %s190 = smul.addr %s189, 16
        %s191 = scalar_lea.vmem [#allocation3], %s190
        %s192 = smul.u32 2, %s18
        %p193 = scmp.lt.s32.totalorder %s192, 3
        %s194 = scalar_select %p193, %s192, 3
        %s195 = smul.addr %s194, 4
        %s196 = scalar_lea.vmem %s0, %s195
        %s197 = smul.u32 2, %s18
        %s198 = smul.u32 2, %s18
        %v200 = vld [vmem:[%s196] sm:$0xf]
        %v201 = vld [vmem:[%s196 + $0x4] sm:$0xf]
        %v202 = vld [vmem:[%s2] sm:$0xf]
        %v203 = vld [vmem:[%s2 + $0x4] sm:$0xf]
        %v204 = vld [vmem:[%s2 + $0x8] sm:$0xf]
        %v205 = vld [vmem:[%s2 + $0xc] sm:$0xf]
        %v206 = vld [vmem:[%s2 + $0x10] sm:$0xf]
        %v207 = vld [vmem:[%s2 + $0x14] sm:$0xf]
        %v208 = vld [vmem:[%s2 + $0x18] sm:$0xf]
        %v209 = vld [vmem:[%s2 + $0x1c] sm:$0xf]
        %v210 = vld [vmem:[%s2 + $0x20] sm:$0xf]
        %v211 = vld [vmem:[%s2 + $0x24] sm:$0xf]
        %v212 = vld [vmem:[%s2 + $0x28] sm:$0xf]
        %v213 = vld [vmem:[%s2 + $0x2c] sm:$0xf]
        %v226 = vunpack.c.l.b16 %v202
        %v227 = vunpack.c.l.b16 %v203
        %v228 = vunpack.c.l.b16 %v204
        %v229 = vunpack.c.l.b16 %v205
        %v230 = vunpack.c.l.b16 %v206
        %v231 = vunpack.c.l.b16 %v207
        %v232 = vunpack.c.l.b16 %v208
        %v233 = vunpack.c.l.b16 %v209
        %v234 = vunpack.c.l.b16 %v210
        %v235 = vunpack.c.l.b16 %v211
        %v236 = vunpack.c.l.b16 %v212
        %v237 = vunpack.c.l.b16 %v213
        %v238 = vpack.c.b16 %v227, %v226
        %v239 = vpack.c.b16 %v229, %v228
        %v240 = vpack.c.b16 %v231, %v230
        %v241 = vpack.c.b16 %v233, %v232
        %v242 = vpack.c.b16 %v235, %v234
        %v243 = vpack.c.b16 %v237, %v236
        %v246 = vunpack.c.l.b16 %v200
        %v247 = vunpack.c.l.b16 %v201
        %v248 = vpack.c.b16 %v247, %v246
        %vm249 = vcmask 261120
        %v251 = vsel %vm249, %v238, 0
        %v254 = vsel %vm249, %v239, 0
        %v257 = vsel %vm249, %v240, 0
        %v260 = vsel %vm249, %v241, 0
        %v263 = vsel %vm249, %v242, 0
        %v266 = vsel %vm249, %v243, 0
        %v269 = vsel %vm249, %v248, 0
        %271 = vmatpush.bf16.xpose.msra.mxu0 0
        %272 = vmatpush.bf16.xpose.msra.mxu0 0
        %273 = vmatpush.bf16.xpose.msra.mxu0 0
        %274 = vmatpush.bf16.xpose.msra.mxu0 0
        %275 = vmatpush.bf16.xpose.msra.mxu0 0
        %276 = vmatpush.bf16.xpose.msra.mxu0 0
        %277 = vmatpush.bf16.xpose.msra.mxu0 0
        %278 = vmatpush.bf16.xpose.msra.mxu0 %v269
        %279 = vmatmul.bf16.gmra.mxu0 %v251
        %v280 = vpop.f32.mrf.mxu0
        %v281 = vadd.f32 0.0, %v280
        %v282 = vpop.f32.mrf.mxu0
        %v283 = vadd.f32 0.0, %v282
        %284 = vmatmul.bf16.gmra.mxu0 %v254
        %v285 = vpop.f32.mrf.mxu0
        %v286 = vadd.f32 0.0, %v285
        %v287 = vpop.f32.mrf.mxu0
        %v288 = vadd.f32 0.0, %v287
        %289 = vmatmul.bf16.gmra.mxu0 %v257
        %v290 = vpop.f32.mrf.mxu0
        %v291 = vadd.f32 0.0, %v290
        %v292 = vpop.f32.mrf.mxu0
        %v293 = vadd.f32 0.0, %v292
        %294 = vmatmul.bf16.gmra.mxu0 %v260
        %v295 = vpop.f32.mrf.mxu0
        %v296 = vadd.f32 0.0, %v295
        %v297 = vpop.f32.mrf.mxu0
        %v298 = vadd.f32 0.0, %v297
        %299 = vmatmul.bf16.gmra.mxu0 %v263
        %v300 = vpop.f32.mrf.mxu0
        %v301 = vadd.f32 0.0, %v300
        %v302 = vpop.f32.mrf.mxu0
        %v303 = vadd.f32 0.0, %v302
        %304 = vmatmul.bf16.gmra.mxu0 %v266
        %v305 = vpop.f32.mrf.mxu0
        %v306 = vadd.f32 0.0, %v305
        %v307 = vpop.f32.mrf.mxu0
        %v308 = vadd.f32 0.0, %v307
        %309 = vdwg.mxu0
        %v310 = vld [vmem:[%s1] sm:$0xff]
        %v311 = vld [vmem:[%s1 + $0x8] sm:$0xff]
        %v312 = vpack.c.bf16 %v281, %v281
        %v313 = vpack.c.bf16 %v291, %v291
        %v314 = vpack.c.bf16 %v301, %v301
        %315 = vxpose.xlu0.c.b16.start [1/8] %v312, 128
        %316 = vxpose.xlu0.c.b16.cont [2/8] 0, 128
        %317 = vxpose.xlu0.c.b16.cont [3/8] 0, 128
        %318 = vxpose.xlu0.c.b16.cont [4/8] 0, 128
        %319 = vxpose.xlu0.c.b16.cont [5/8] 0, 128
        %320 = vxpose.xlu0.c.b16.cont [6/8] 0, 128
        %321 = vxpose.xlu0.c.b16.cont [7/8] 0, 128
        %322 = vxpose.xlu0.c.b16.end [8/8] 0, 128
        %v323 = vpop.trf.xlu0
        %v324 = vpop.trf.xlu0
        %v325 = vpop.trf.xlu0
        %v326 = vpop.trf.xlu0
        %v327 = vpop.trf.xlu0
        %v328 = vpop.trf.xlu0
        %v329 = vpop.trf.xlu0
        %v330 = vpop.trf.xlu0
        %vm331 = vcmask 64512
        %v333 = vsel %vm331, %v323, 0
        %vm335 = vcmask 1043456
        %v337 = vsel %vm335, %v313, 0
        %339 = vmatpush.bf16.msra.mxu0 0
        %340 = vmatpush.bf16.msra.mxu0 0
        %341 = vmatpush.bf16.msra.mxu0 0
        %342 = vmatpush.bf16.msra.mxu0 0
        %343 = vmatpush.bf16.msra.mxu0 0
        %344 = vmatpush.bf16.msra.mxu0 0
        %345 = vmatpush.bf16.msra.mxu0 0
        %346 = vmatpush.bf16.msra.mxu0 %v337
        %347 = vmatmul.bf16.gmra.mxu0 %v333
        %v348 = vpop.f32.mrf.mxu0
        %v349 = vadd.f32 %v310, %v348
        %v350 = vpop.f32.mrf.mxu0
        %v351 = vadd.f32 %v311, %v350
        %352 = vdwg.mxu0
        %vm353 = vcmask 130048
        %v354 = vsel %vm353, %v349, -inf
        %355 = vmax.xlane.f32.xlu0 %v354
        %v356 = vpop.xlane.xlu0 %355
        %v357 = vsel %vm353, %v351, -inf
        %358 = vmax.xlane.f32.xlu0 %v357
        %v359 = vpop.xlane.xlu0 %358
        %v360 = vsub.f32 %v349, %v356
        %v361 = vsub.f32 %v351, %v359
        %v362 = vmul.f32 %v360, 1.442695
        %v363 = vpow.pop %v362
        %v364 = vmul.f32 %v361, 1.442695
        %v365 = vpow.pop %v364
        %v366 = vsel %vm353, %v363, 0.0
        %367 = vadd.xlane.f32.xlu0 %v366
        %v368 = vpop.xlane.xlu0 %367
        %v369 = vsel %vm353, %v365, 0.0
        %370 = vadd.xlane.f32.xlu0 %v369
        %v371 = vpop.xlane.xlu0 %370
        %v372 = vrcp.pop %v368
        %v373 = vrcp.pop %v371
        %v374 = vmul.f32 %v363, %v372
        %v375 = vmul.f32 %v365, %v373
        %v376 = vpack.c.bf16 %v375, %v374
        %v378 = vsel %vm353, %v314, 0
        %v381 = vsel %vm353, %v376, 0
        %383 = vmatpush.bf16.xpose.msra.mxu0 0
        %384 = vmatpush.bf16.xpose.msra.mxu0 0
        %385 = vmatpush.bf16.xpose.msra.mxu0 0
        %386 = vmatpush.bf16.xpose.msra.mxu0 0
        %387 = vmatpush.bf16.xpose.msra.mxu0 0
        %388 = vmatpush.bf16.xpose.msra.mxu0 0
        %389 = vmatpush.bf16.xpose.msra.mxu0 0
        %390 = vmatpush.bf16.xpose.msra.mxu0 %v381
        %391 = vmatmul.bf16.gmra.mxu0 %v378
        %v392 = vpop.f32.mrf.mxu0
        %v393 = vadd.f32 0.0, %v392
        %v394 = vpop.f32.mrf.mxu0
        %395 = vdwg.mxu0
        %396 = vst.msk [vmem:[#allocation2] sm:$0xff] %vm353, %v393
        %v397 = vpack.c.bf16 %v283, %v283
        %v398 = vpack.c.bf16 %v293, %v293
        %v399 = vpack.c.bf16 %v303, %v303
        %400 = vxpose.xlu0.c.b16.start [1/8] %v397, 128
        %401 = vxpose.xlu0.c.b16.cont [2/8] 0, 128
        %402 = vxpose.xlu0.c.b16.cont [3/8] 0, 128
        %403 = vxpose.xlu0.c.b16.cont [4/8] 0, 128
        %404 = vxpose.xlu0.c.b16.cont [5/8] 0, 128
        %405 = vxpose.xlu0.c.b16.cont [6/8] 0, 128
        %406 = vxpose.xlu0.c.b16.cont [7/8] 0, 128
        %407 = vxpose.xlu0.c.b16.end [8/8] 0, 128
        %v408 = vpop.trf.xlu0
        %v409 = vpop.trf.xlu0
        %v410 = vpop.trf.xlu0
        %v411 = vpop.trf.xlu0
        %v412 = vpop.trf.xlu0
        %v413 = vpop.trf.xlu0
        %v414 = vpop.trf.xlu0
        %v415 = vpop.trf.xlu0
        %v417 = vsel %vm331, %v408, 0
        %v420 = vsel %vm335, %v398, 0
        %422 = vmatpush.bf16.msra.mxu0 0
        %423 = vmatpush.bf16.msra.mxu0 0
        %424 = vmatpush.bf16.msra.mxu0 0
        %425 = vmatpush.bf16.msra.mxu0 0
        %426 = vmatpush.bf16.msra.mxu0 0
        %427 = vmatpush.bf16.msra.mxu0 0
        %428 = vmatpush.bf16.msra.mxu0 0
        %429 = vmatpush.bf16.msra.mxu0 %v420
        %430 = vmatmul.bf16.gmra.mxu0 %v417
        %v431 = vpop.f32.mrf.mxu0
        %v432 = vadd.f32 %v310, %v431
        %v433 = vpop.f32.mrf.mxu0
        %v434 = vadd.f32 %v311, %v433
        %435 = vdwg.mxu0
        %v436 = vsel %vm353, %v432, -inf
        %437 = vmax.xlane.f32.xlu0 %v436
        %v438 = vpop.xlane.xlu0 %437
        %v439 = vsel %vm353, %v434, -inf
        %440 = vmax.xlane.f32.xlu0 %v439
        %v441 = vpop.xlane.xlu0 %440
        %v442 = vsub.f32 %v432, %v438
        %v443 = vsub.f32 %v434, %v441
        %v444 = vmul.f32 %v442, 1.442695
        %v445 = vpow.pop %v444
        %v446 = vmul.f32 %v443, 1.442695
        %v447 = vpow.pop %v446
        %v448 = vsel %vm353, %v445, 0.0
        %449 = vadd.xlane.f32.xlu0 %v448
        %v450 = vpop.xlane.xlu0 %449
        %v451 = vsel %vm353, %v447, 0.0
        %452 = vadd.xlane.f32.xlu0 %v451
        %v453 = vpop.xlane.xlu0 %452
        %v454 = vrcp.pop %v450
        %v455 = vrcp.pop %v453
        %v456 = vmul.f32 %v445, %v454
        %v457 = vmul.f32 %v447, %v455
        %v458 = vpack.c.bf16 %v457, %v456
        %v460 = vsel %vm353, %v399, 0
        %v463 = vsel %vm353, %v458, 0
        %465 = vmatpush.bf16.xpose.msra.mxu0 0
        %466 = vmatpush.bf16.xpose.msra.mxu0 0
        %467 = vmatpush.bf16.xpose.msra.mxu0 0
        %468 = vmatpush.bf16.xpose.msra.mxu0 0
        %469 = vmatpush.bf16.xpose.msra.mxu0 0
        %470 = vmatpush.bf16.xpose.msra.mxu0 0
        %471 = vmatpush.bf16.xpose.msra.mxu0 0
        %472 = vmatpush.bf16.xpose.msra.mxu0 %v463
        %473 = vmatmul.bf16.gmra.mxu0 %v460
        %v474 = vpop.f32.mrf.mxu0
        %v475 = vadd.f32 0.0, %v474
        %v476 = vpop.f32.mrf.mxu0
        %477 = vdwg.mxu0
        %478 = vst.msk [vmem:[#allocation2 + $0x8] sm:$0xff] %vm353, %v475
        %v479 = vpack.c.bf16 %v286, %v286
        %v480 = vpack.c.bf16 %v296, %v296
        %v481 = vpack.c.bf16 %v306, %v306
        %482 = vxpose.xlu0.c.b16.start [1/8] %v479, 128
        %483 = vxpose.xlu0.c.b16.cont [2/8] 0, 128
        %484 = vxpose.xlu0.c.b16.cont [3/8] 0, 128
        %485 = vxpose.xlu0.c.b16.cont [4/8] 0, 128
        %486 = vxpose.xlu0.c.b16.cont [5/8] 0, 128
        %487 = vxpose.xlu0.c.b16.cont [6/8] 0, 128
        %488 = vxpose.xlu0.c.b16.cont [7/8] 0, 128
        %489 = vxpose.xlu0.c.b16.end [8/8] 0, 128
        %v490 = vpop.trf.xlu0
        %v491 = vpop.trf.xlu0
        %v492 = vpop.trf.xlu0
        %v493 = vpop.trf.xlu0
        %v494 = vpop.trf.xlu0
        %v495 = vpop.trf.xlu0
        %v496 = vpop.trf.xlu0
        %v497 = vpop.trf.xlu0
        %v499 = vsel %vm331, %v490, 0
        %v502 = vsel %vm335, %v480, 0
        %504 = vmatpush.bf16.msra.mxu0 0
        %505 = vmatpush.bf16.msra.mxu0 0
        %506 = vmatpush.bf16.msra.mxu0 0
        %507 = vmatpush.bf16.msra.mxu0 0
        %508 = vmatpush.bf16.msra.mxu0 0
        %509 = vmatpush.bf16.msra.mxu0 0
        %510 = vmatpush.bf16.msra.mxu0 0
        %511 = vmatpush.bf16.msra.mxu0 %v502
        %512 = vmatmul.bf16.gmra.mxu0 %v499
        %v513 = vpop.f32.mrf.mxu0
        %v514 = vadd.f32 %v310, %v513
        %v515 = vpop.f32.mrf.mxu0
        %v516 = vadd.f32 %v311, %v515
        %517 = vdwg.mxu0
        %v518 = vsel %vm353, %v514, -inf
        %519 = vmax.xlane.f32.xlu0 %v518
        %v520 = vpop.xlane.xlu0 %519
        %v521 = vsel %vm353, %v516, -inf
        %522 = vmax.xlane.f32.xlu0 %v521
        %v523 = vpop.xlane.xlu0 %522
        %v524 = vsub.f32 %v514, %v520
        %v525 = vsub.f32 %v516, %v523
        %v526 = vmul.f32 %v524, 1.442695
        %v527 = vpow.pop %v526
        %v528 = vmul.f32 %v525, 1.442695
        %v529 = vpow.pop %v528
        %v530 = vsel %vm353, %v527, 0.0
        %531 = vadd.xlane.f32.xlu0 %v530
        %v532 = vpop.xlane.xlu0 %531
        %v533 = vsel %vm353, %v529, 0.0
        %534 = vadd.xlane.f32.xlu0 %v533
        %v535 = vpop.xlane.xlu0 %534
        %v536 = vrcp.pop %v532
        %v537 = vrcp.pop %v535
        %v538 = vmul.f32 %v527, %v536
        %v539 = vmul.f32 %v529, %v537
        %v540 = vpack.c.bf16 %v539, %v538
        %v542 = vsel %vm353, %v481, 0
        %v545 = vsel %vm353, %v540, 0
        %547 = vmatpush.bf16.xpose.msra.mxu0 0
        %548 = vmatpush.bf16.xpose.msra.mxu0 0
        %549 = vmatpush.bf16.xpose.msra.mxu0 0
        %550 = vmatpush.bf16.xpose.msra.mxu0 0
        %551 = vmatpush.bf16.xpose.msra.mxu0 0
        %552 = vmatpush.bf16.xpose.msra.mxu0 0
        %553 = vmatpush.bf16.xpose.msra.mxu0 0
        %554 = vmatpush.bf16.xpose.msra.mxu0 %v545
        %555 = vmatmul.bf16.gmra.mxu0 %v542
        %v556 = vpop.f32.mrf.mxu0
        %v557 = vadd.f32 0.0, %v556
        %v558 = vpop.f32.mrf.mxu0
        %559 = vdwg.mxu0
        %560 = vst.msk [vmem:[#allocation2 + $0x10] sm:$0xff] %vm353, %v557
        %v561 = vpack.c.bf16 %v288, %v288
        %v562 = vpack.c.bf16 %v298, %v298
        %v563 = vpack.c.bf16 %v308, %v308
        %564 = vxpose.xlu0.c.b16.start [1/8] %v561, 128
        %565 = vxpose.xlu0.c.b16.cont [2/8] 0, 128
        %566 = vxpose.xlu0.c.b16.cont [3/8] 0, 128
        %567 = vxpose.xlu0.c.b16.cont [4/8] 0, 128
        %568 = vxpose.xlu0.c.b16.cont [5/8] 0, 128
        %569 = vxpose.xlu0.c.b16.cont [6/8] 0, 128
        %570 = vxpose.xlu0.c.b16.cont [7/8] 0, 128
        %571 = vxpose.xlu0.c.b16.end [8/8] 0, 128
        %v572 = vpop.trf.xlu0
        %v573 = vpop.trf.xlu0
        %v574 = vpop.trf.xlu0
        %v575 = vpop.trf.xlu0
        %v576 = vpop.trf.xlu0
        %v577 = vpop.trf.xlu0
        %v578 = vpop.trf.xlu0
        %v579 = vpop.trf.xlu0
        %v581 = vsel %vm331, %v572, 0
        %v584 = vsel %vm335, %v562, 0
        %586 = vmatpush.bf16.msra.mxu0 0
        %587 = vmatpush.bf16.msra.mxu0 0
        %588 = vmatpush.bf16.msra.mxu0 0
        %589 = vmatpush.bf16.msra.mxu0 0
        %590 = vmatpush.bf16.msra.mxu0 0
        %591 = vmatpush.bf16.msra.mxu0 0
        %592 = vmatpush.bf16.msra.mxu0 0
        %593 = vmatpush.bf16.msra.mxu0 %v584
        %594 = vmatmul.bf16.gmra.mxu0 %v581
        %v595 = vpop.f32.mrf.mxu0
        %v596 = vadd.f32 %v310, %v595
        %v597 = vpop.f32.mrf.mxu0
        %v598 = vadd.f32 %v311, %v597
        %599 = vdwg.mxu0
        %v600 = vsel %vm353, %v596, -inf
        %601 = vmax.xlane.f32.xlu0 %v600
        %v602 = vpop.xlane.xlu0 %601
        %v603 = vsel %vm353, %v598, -inf
        %604 = vmax.xlane.f32.xlu0 %v603
        %v605 = vpop.xlane.xlu0 %604
        %v606 = vsub.f32 %v596, %v602
        %v607 = vsub.f32 %v598, %v605
        %v608 = vmul.f32 %v606, 1.442695
        %v609 = vpow.pop %v608
        %v610 = vmul.f32 %v607, 1.442695
        %v611 = vpow.pop %v610
        %v612 = vsel %vm353, %v609, 0.0
        %613 = vadd.xlane.f32.xlu0 %v612
        %v614 = vpop.xlane.xlu0 %613
        %v615 = vsel %vm353, %v611, 0.0
        %616 = vadd.xlane.f32.xlu0 %v615
        %v617 = vpop.xlane.xlu0 %616
        %v618 = vrcp.pop %v614
        %v619 = vrcp.pop %v617
        %v620 = vmul.f32 %v609, %v618
        %v621 = vmul.f32 %v611, %v619
        %v622 = vpack.c.bf16 %v621, %v620
        %v624 = vsel %vm353, %v563, 0
        %v627 = vsel %vm353, %v622, 0
        %629 = vmatpush.bf16.xpose.msra.mxu0 0
        %630 = vmatpush.bf16.xpose.msra.mxu0 0
        %631 = vmatpush.bf16.xpose.msra.mxu0 0
        %632 = vmatpush.bf16.xpose.msra.mxu0 0
        %633 = vmatpush.bf16.xpose.msra.mxu0 0
        %634 = vmatpush.bf16.xpose.msra.mxu0 0
        %635 = vmatpush.bf16.xpose.msra.mxu0 0
        %636 = vmatpush.bf16.xpose.msra.mxu0 %v627
        %637 = vmatmul.bf16.gmra.mxu0 %v624
        %v638 = vpop.f32.mrf.mxu0
        %v639 = vadd.f32 0.0, %v638
        %v640 = vpop.f32.mrf.mxu0
        %641 = vdwg.mxu0
        %642 = vst.msk [vmem:[#allocation2 + $0x18] sm:$0xff] %vm353, %v639
        %v643 = vld [vmem:[#allocation2] sm:$0xff]
        %v644 = vld [vmem:[#allocation2 + $0x8] sm:$0xff]
        %v645 = vld [vmem:[#allocation2 + $0x10] sm:$0xff]
        %v646 = vld [vmem:[#allocation2 + $0x18] sm:$0xff]
        %v647 = vpack.c.bf16 %v644, %v643
        %v648 = vpack.c.bf16 %v646, %v645
        %v649 = vld [vmem:[%s3] sm:$0xf]
        %v650 = vld [vmem:[%s3 + $0x4] sm:$0xf]
        %v651 = vld [vmem:[%s3 + $0x8] sm:$0xf]
        %v652 = vld [vmem:[%s3 + $0xc] sm:$0xf]
        %653 = vxpose.xlu0.c.b16.start [1/8] %v647, 128
        %654 = vxpose.xlu0.c.b16.cont [2/8] %v648, 128
        %655 = vxpose.xlu0.c.b16.cont [3/8] 0, 128
        %656 = vxpose.xlu0.c.b16.cont [4/8] 0, 128
        %657 = vxpose.xlu0.c.b16.cont [5/8] 0, 128
        %658 = vxpose.xlu0.c.b16.cont [6/8] 0, 128
        %659 = vxpose.xlu0.c.b16.cont [7/8] 0, 128
        %660 = vxpose.xlu0.c.b16.end [8/8] 0, 128
        %v661 = vpop.trf.xlu0
        %v662 = vpop.trf.xlu0
        %v663 = vpop.trf.xlu0
        %v664 = vpop.trf.xlu0
        %v665 = vpop.trf.xlu0
        %v666 = vpop.trf.xlu0
        %v667 = vpop.trf.xlu0
        %v668 = vpop.trf.xlu0
        %v673 = vunpack.c.l.b16 %v649
        %v674 = vunpack.c.l.b16 %v650
        %v675 = vunpack.c.l.b16 %v651
        %v676 = vunpack.c.l.b16 %v652
        %v677 = vpack.c.b16 %v674, %v673
        %v678 = vpack.c.b16 %v676, %v675
        %v682 = vsel %vm249, %v661, 0
        %684 = vmatpush.bf16.msra.mxu0 0
        %685 = vmatpush.bf16.msra.mxu0 0
        %686 = vmatpush.bf16.msra.mxu0 0
        %687 = vmatpush.bf16.msra.mxu0 0
        %688 = vmatpush.bf16.msra.mxu0 0
        %689 = vmatpush.bf16.msra.mxu0 0
        %690 = vmatpush.bf16.msra.mxu0 %v678
        %691 = vmatpush.bf16.msra.mxu0 %v677
        %692 = vmatmul.bf16.gmra.mxu0 %v682
        %v693 = vpop.f32.mrf.mxu0
        %v694 = vadd.f32 0.0, %v693
        %v695 = vpop.f32.mrf.mxu0
        %v696 = vadd.f32 0.0, %v695
        %697 = vdwg.mxu0
        %698 = vst.msk [vmem:[%s191] sm:$0xff] %vm249, %v694
        %699 = vst.msk [vmem:[%s191 + $0x8] sm:$0xff] %vm249, %v696
        %s700 = sand.u32 %s115, 1
        %s701 = scalar_lea.sflag [#allocation4], %s700
        %s702 = sand.u32 %s115, 1
        %s703 = smul.addr %s702, 16
        %s704 = scalar_lea.vmem [#allocation3], %s703
        // Predicated region
        $region37: #{tpu_custom_call.1} parent=35 // pred_check
          %p705 = pneg %p125
        $region38: #{tpu_custom_call.1} parent=35 // pred_check_branch
          %707 = sbr.rel (%p705) target = $region40
        $region39: #{tpu_custom_call.1} parent=35 // pred_region
          %s708 = smul.u32 2, %s18
          %710 = vsyncadd %s701, 0
          %s711 = smul.addr %s708, 8
          %s712 = scalar_lea.hbm %s4, %s711
          %s713 = sshll.u32 %s704, 4
          %s714 = int_to_ptr.vmem [resolvable:$true] %s713
          %s715 = sshll.u32 %s712, 4
          %s716 = int_to_ptr.hbm [resolvable:$true] %s715
          %721 = dma.vmem_to_hbm [thread:$0]  %s714, 256, %s716, %s701, 128, 128, 8
        $region40: #{tpu_custom_call.1} parent=35 // pred_fallthru
          _
      $region36: #{tpu_custom_call.1} parent=5 // pred_fallthru
        _
      %p722 = scmp.le.s32.totalorder 2, %s13
      // Predicated region
      $region41: #{tpu_custom_call.1} parent=5 // pred_check
        %p723 = pneg %p722
      $region42: #{tpu_custom_call.1} parent=5 // pred_check_branch
        %725 = sbr.rel (%p723) target = $region44
      $region43: #{tpu_custom_call.1} parent=5 // pred_region
        %s726 = ssub.s32 %s13, 2
        // Predicated region
        $region45: #{tpu_custom_call.1} parent=43 // pred_check
          %p727 = pneg %p131
        $region46: #{tpu_custom_call.1} parent=43 // pred_check_branch
          %729 = sbr.rel (%p727) target = $region48
        $region47: #{tpu_custom_call.1} parent=43 // pred_region
          %s730 = sand.u32 %s116, 1
          %s731 = scalar_lea.sflag [#allocation4], %s730
          %s732 = sand.u32 %s116, 1
          %s733 = smul.addr %s732, 16
          %s734 = scalar_lea.vmem [#allocation3], %s733
          %736 = dma.done %s731, 256
        $region48: #{tpu_custom_call.1} parent=43 // pred_fallthru
          _
      $region44: #{tpu_custom_call.1} parent=5 // pred_fallthru
        _
    $region6: #{tpu_custom_call.1} parent=1 // loop_footer
      %s17 = sadd.s32 1, %s13
    $region7: #{tpu_custom_call.1} parent=1 // loop_footer_branch
      %12 = sbr.rel target = $region3
    $region8: #{tpu_custom_call.1} parent=1 // loop_exit
      _
    %737 = vsyncpa [#allocation4], 1
    %s738 = scalar_lea.sflag [#allocation4], 1
    %739 = vsyncpa %s738, 1

</llo_original>
